<compile_context>
chip_gen: v6e
topology: v6e:2x2x1
jax: 0.10.0
libtpu: 0.0.40
codegen_flags: <defaults>
</compile_context>

<pallas_src>
import jax
import jax.numpy as jnp
from jax.experimental import pallas as pl
from jax.experimental.pallas import tpu as pltpu


def _normalize_kernel(scale_ref, bias_ref, x_ref, o_ref):
    # scale_ref / bias_ref: (block_rows, 1) f32 (per (n, c)-row affine params).
    # x_ref / o_ref:        (block_rows, block_cols) in VMEM.
    x = x_ref[...].astype(jnp.float32)
    o_ref[...] = (x * scale_ref[...] + bias_ref[...]).astype(o_ref.dtype)


def _round_up(v, unit):
    return ((v + unit - 1) // unit) * unit


def _largest_divisor_tile(dim, unit, cap):
    """Largest multiple of `unit` that divides `dim` and is <= max(unit, cap).

    Assumes dim % unit == 0 (guaranteed by padding in the caller).
    """
    cap = max(unit, min(dim, cap))
    best = unit
    t = unit
    while t <= cap:
        if dim % t == 0:
            best = t
        t += unit
    return best


def _chip_tuning():
    """(tile_byte_target, vmem_limit_bytes_or_None, want_row_split_for_megacore)."""
    try:
        kind = jax.devices()[0].device_kind.lower()
    except Exception:  # pragma: no cover - defensive; fall back to conservative.
        kind = ""
    if "v7" in kind or "7x" in kind:
        # ~7 MiB tiles; 4 double-buffered in+out tiles ~= 28 MiB, raise scoped
        # VMEM above the 32 MiB default to keep headroom on the 64 MiB part.
        return 7 * 1024 * 1024, 48 << 20, True
    if "v6" in kind:
        # ~4 MiB tiles fit the 32 MiB default scoped VMEM with double buffering.
        return 4 * 1024 * 1024, None, False
    # v5e (16 MiB default scoped VMEM) and anything unrecognized: stay at 2 MiB.
    return 2 * 1024 * 1024, None, False


def normalize(x, mean, std):
    """(x - mean[None, :, None, None]) / std[None, :, None, None] for NCHW x."""
    N, C, H, W = x.shape
    assert mean.shape == (C,) and std.shape == (C,)
    NC, HW = N * C, H * W

    itemsize = jnp.dtype(x.dtype).itemsize
    # Sublane packing unit: 8 rows/vreg at 4 bytes, 16 at 2 bytes, 32 at 1 byte.
    sublane = {4: 8, 2: 16, 1: 32}.get(itemsize, 8)
    lane = 128

    tile_bytes, vmem_limit, want_megacore_split = _chip_tuning()

    # Lane-dense layout: rows = (n, c) pairs, columns = flattened H*W plane.
    # Pad to (sublane, 128)-aligned extents so every block is unmasked and
    # fully pipelined (no full-dimension fallback blocks).
    NCp = _round_up(NC, sublane)
    HWp = _round_up(HW, lane)

    x2 = x.reshape(NC, HW)
    if NCp != NC or HWp != HW:
        x2 = jnp.pad(x2, ((0, NCp - NC), (0, HWp - HW)))

    # Per-channel affine: (x - m) / s == x * (1/s) + (-m/s). Replicate per row.
    scale = 1.0 / std.astype(jnp.float32)
    bias = -mean.astype(jnp.float32) * scale
    scale_r = jnp.tile(scale, N)
    bias_r = jnp.tile(bias, N)
    if NCp != NC:
        scale_r = jnp.pad(scale_r, (0, NCp - NC))   # pad rows: 0*x + 0 = 0
        bias_r = jnp.pad(bias_r, (0, NCp - NC))
    scale_r = scale_r.reshape(NCp, 1)
    bias_r = bias_r.reshape(NCp, 1)

    # --- Tile selection: br * bc * itemsize <= tile_bytes, jointly. ---------
    max_elems = max(sublane * lane, tile_bytes // itemsize)
    if sublane * HWp <= max_elems:
        # Prefer full rows (contiguous HBM DMAs, lane-dense output); shrink br.
        bc = HWp
        br = _largest_divisor_tile(NCp, sublane, max_elems // bc)
    else:
        # A single sublane-group of full rows already exceeds the budget:
        # keep br at the sublane unit and split the column axis instead.
        br = sublane
        bc = _largest_divisor_tile(HWp, lane, max_elems // br)

    # v7x megacore: make sure the row (parallel) axis has >= 2 blocks when the
    # row count allows it, so both TensorCores get a share of the streaming.
    if want_megacore_split and NCp // br < 2 and NCp >= 2 * sublane:
        br = _largest_divisor_tile(NCp, sublane, NCp // 2)

    grid = (NCp // br, HWp // bc)

    out2 = pl.pallas_call(
        _normalize_kernel,
        out_shape=jax.ShapeDtypeStruct((NCp, HWp), x.dtype),
        grid=grid,
        in_specs=[
            pl.BlockSpec((br, 1), lambda i, j: (i, 0)),    # per-row scale
            pl.BlockSpec((br, 1), lambda i, j: (i, 0)),    # per-row bias
            pl.BlockSpec((br, bc), lambda i, j: (i, j)),   # x tile
        ],
        out_specs=pl.BlockSpec((br, bc), lambda i, j: (i, j)),
        compiler_params=pltpu.CompilerParams(
            dimension_semantics=("parallel", "parallel"),
            vmem_limit_bytes=vmem_limit),
    )(scale_r, bias_r, x2)

    return out2[:NC, :HW].reshape(N, C, H, W)


if __name__ == "__main__":
    key = jax.random.PRNGKey(0)
    # NormalizeLayer hard-codes 3 channels via .view(1, 3, 1, 1).
    x = jax.random.uniform(key, (2, 3, 16, 16), dtype=jnp.float32)

    # Deterministic "parameters" (standard ImageNet-style mean/std).
    mean = jnp.array([0.485, 0.456, 0.406], dtype=jnp.float32)
    std = jnp.array([0.229, 0.224, 0.225], dtype=jnp.float32)

    out = normalize(x, mean, std)
    jax.block_until_ready(out)

    ref = (x - mean.reshape(1, 3, 1, 1)) / std.reshape(1, 3, 1, 1)
    assert out.shape == x.shape and out.dtype == x.dtype
    # FMA with precomputed 1/std differs from (x-mean)/std at the ~1 ulp level.
    assert jnp.allclose(out, ref, atol=1e-5, rtol=1e-5), "mismatch vs JAX reference"
    print("KERNEL_OK")
</pallas_src>

<mosaic_0001>
module attributes {stable_mosaic.version = 11 : i64} {
  func.func @_normalize_kernel(%arg0: i32, %arg1: i32, %arg2: memref<8x1xf32, #tpu.memory_space<vmem>>, %arg3: memref<8x1xf32, #tpu.memory_space<vmem>>, %arg4: memref<8x256xf32, #tpu.memory_space<vmem>>, %arg5: memref<8x256xf32, #tpu.memory_space<vmem>>) attributes {dimension_semantics = [#tpu.dimension_semantics<parallel>, #tpu.dimension_semantics<parallel>], iteration_bounds = array<i64: 1, 1>, scalar_prefetch = 0 : i64, scratch_operands = 0 : i64, tpu.core_type = #tpu.core_type<tc>, window_params = [{transform_indices = @transform_0, window_bounds = array<i64: 8, 1>}, {transform_indices = @transform_1, window_bounds = array<i64: 8, 1>}, {transform_indices = @transform_2, window_bounds = array<i64: 8, 256>}, {transform_indices = @transform_3, window_bounds = array<i64: 8, 256>}]} {
    %c0 = arith.constant 0 : index
    %c0_0 = arith.constant 0 : index
    %0 = vector.load %arg4[%c0, %c0_0] : memref<8x256xf32, #tpu.memory_space<vmem>>, vector<8x256xf32>
    %c0_1 = arith.constant 0 : index
    %c0_2 = arith.constant 0 : index
    %1 = vector.load %arg2[%c0_1, %c0_2] : memref<8x1xf32, #tpu.memory_space<vmem>>, vector<8x1xf32>
    %2 = vector.broadcast %1 : vector<8x1xf32> to vector<8x256xf32>
    %3 = arith.mulf %0, %2 : vector<8x256xf32>
    %c0_3 = arith.constant 0 : index
    %c0_4 = arith.constant 0 : index
    %4 = vector.load %arg3[%c0_3, %c0_4] : memref<8x1xf32, #tpu.memory_space<vmem>>, vector<8x1xf32>
    %5 = vector.broadcast %4 : vector<8x1xf32> to vector<8x256xf32>
    %6 = arith.addf %3, %5 : vector<8x256xf32>
    %c0_5 = arith.constant 0 : index
    %c0_6 = arith.constant 0 : index
    %7 = vector.load %arg5[%c0_5, %c0_6] : memref<8x256xf32, #tpu.memory_space<vmem>>, vector<8x256xf32>
    tpu.vector_store %arg5[%c0_5, %c0_6], %6 {strides = array<i32>} : memref<8x256xf32, #tpu.memory_space<vmem>>, vector<8x256xf32>,
    return
  }
  func.func @transform_0(%arg0: i32, %arg1: i32) -> (i32, i32) {
    %c0_i32 = arith.constant 0 : i32
    %c0_i32_0 = arith.constant 0 : i32
    return %arg0, %c0_i32 : i32, i32
  }
  func.func @transform_1(%arg0: i32, %arg1: i32) -> (i32, i32) {
    %c0_i32 = arith.constant 0 : i32
    %c0_i32_0 = arith.constant 0 : i32
    return %arg0, %c0_i32 : i32, i32
  }
  func.func @transform_2(%arg0: i32, %arg1: i32) -> (i32, i32) {
    %c0_i32 = arith.constant 0 : i32
    return %arg0, %arg1 : i32, i32
  }
  func.func @transform_3(%arg0: i32, %arg1: i32) -> (i32, i32) {
    %c0_i32 = arith.constant 0 : i32
    return %arg0, %arg1 : i32, i32
  }
}

</mosaic_0001>

<llo_original>
// kernel: tpu_custom_call.1
$region0: #{tpu_custom_call.1}
  #allocation0 [shape = 'u32[]', space=smem, size = 0x4, offset = 0x4, fixed_abs, tag = 'smem constant byte address 0x4 - core index']
  #allocation1 [shape = 'u32[144,128]{1,0:T(1,128)}', space=vmem, size = 0x12000, scoped, tag = 'internal scratch']
  %s0 = inlined_call_operand.vmem [shape: f32[8,1], index: 0, kind: input, shape index: {}]
  %s1 = inlined_call_operand.vmem [shape: f32[8,1], index: 1, kind: input, shape index: {}]
  %s2 = inlined_call_operand.vmem [shape: f32[8,256], index: 2, kind: input, shape index: {}]
  %s3 = inlined_call_operand.hbm [shape: f32[8,256], index: 3, kind: output, shape index: {}]
  %s4 = sld [smem:[#allocation0]]
  $region22: #{tpu_custom_call.1} parent=0
    _
  %s6 = ssub.s32 1, %s4
  %s7 = scalar_select 0, %s6, %s4
  $region1: #{tpu_custom_call.1} parent=0
    #allocation2 [shape = 'u8[8192]{0}', space=vmem, size = 0x2000, scoped, tag = 'output window, operand 0, single buffered']
    #allocation3 [shape = 's32[1]{0}', space=sflag, size = 0x4, scoped, tag = 'scoped memory for tpu_custom_call.1']
    %8 = vsyncpa [#allocation3], 0
    // Predicated region
    $region2: #{tpu_custom_call.1} parent=1 // pred_check
      _
    $region3: #{tpu_custom_call.1} parent=1 // pred_check_branch
      %10 = sbr.rel (0) target = $region5
    $region4: #{tpu_custom_call.1} parent=1 // pred_region
      _
    $region5: #{tpu_custom_call.1} parent=1 // pred_fallthru
      _
    // Predicated region
    $region6: #{tpu_custom_call.1} parent=1 // pred_check
      _
    $region7: #{tpu_custom_call.1} parent=1 // pred_check_branch
      %12 = sbr.rel (0) target = $region9
    $region8: #{tpu_custom_call.1} parent=1 // pred_region
      _
    $region9: #{tpu_custom_call.1} parent=1 // pred_fallthru
      _
    // Predicated region
    $region10: #{tpu_custom_call.1} parent=1 // pred_check
      _
    $region11: #{tpu_custom_call.1} parent=1 // pred_check_branch
      %14 = sbr.rel (0) target = $region13
    $region12: #{tpu_custom_call.1} parent=1 // pred_region
      _
    $region13: #{tpu_custom_call.1} parent=1 // pred_fallthru
      _
    %v15 = vld [vmem:[%s2] sm:$0xff]
    %v16 = vld [vmem:[%s2 + $0x8] sm:$0xff]
    %v17 = vld [vmem:[%s0] sm:$0xff]
    %19 = vset.pattern.permute.xlu0 0
    %20 = vperm.xlu0 %19, %v17
    %v21 = vpop.permute.xlu0 %20
    %v23 = vmul.f32 %v15, %v21
    %v24 = vmul.f32 %v16, %v21
    %v25 = vld [vmem:[%s1] sm:$0xff]
    %27 = vset.pattern.permute.xlu0 0
    %28 = vperm.xlu0 %27, %v25
    %v29 = vpop.permute.xlu0 %28
    %v31 = vadd.f32 %v23, %v29
    %v32 = vadd.f32 %v24, %v29
    %33 = vst [vmem:[#allocation2] sm:$0xff] %v31
    %34 = vst [vmem:[#allocation2 + $0x8] sm:$0xff] %v32
    // Predicated region
    $region14: #{tpu_custom_call.1} parent=1 // pred_check
      _
    $region15: #{tpu_custom_call.1} parent=1 // pred_check_branch
      %36 = sbr.rel (0) target = $region17
    $region16: #{tpu_custom_call.1} parent=1 // pred_region
      %s38 = ssub.s32 256, 256
      %39 = vsyncadd [#allocation3], %s38
      %s41 = sshll.u32 [#allocation2], 4
      %s42 = int_to_ptr.vmem [resolvable:$true] %s41
      %44 = dma.vmem_to_hbm [thread:$0]  %s42, 256, %s3, [#allocation3]
    $region17: #{tpu_custom_call.1} parent=1 // pred_fallthru
      _
    // Predicated region
    $region18: #{tpu_custom_call.1} parent=1 // pred_check
      _
    $region19: #{tpu_custom_call.1} parent=1 // pred_check_branch
      %46 = sbr.rel (0) target = $region21
    $region20: #{tpu_custom_call.1} parent=1 // pred_region
      %47 = dma.done [#allocation3], 256
    $region21: #{tpu_custom_call.1} parent=1 // pred_fallthru
      _
    %48 = vsyncpa [#allocation3], 1

</llo_original>
